<compile_context>
chip_gen: v7x
topology: tpu7x:2x2x1
jax: 0.10.0
libtpu: 0.0.40
codegen_flags: <defaults>
</compile_context>

<pallas_src>
import functools

import numpy as np

import jax
import jax.numpy as jnp
from jax import lax
from jax.experimental import pallas as pl
from jax.experimental.pallas import tpu as pltpu


def _halo_pad(W):
    # Left/right halo of the flattened spatial axis, rounded up to a full lane
    # tile so the interior store and the halo zeroing are 128-lane aligned.
    return ((W + 1 + 127) // 128) * 128


# ----------------------------- in-kernel helpers ---------------------------- #

def _pw_fma(w, x, b, relu):
    """1x1 conv + bias (+ReLU) as exact-f32 VPU broadcast-FMAs.

    w: (Cout, Cin) with BN scale folded into rows; x: (Cin, P); b: (Cout, 1).
    Cin <= 8, so an unrolled FMA loop is cheaper than a tiny MXU matmul and
    stays exact in f32.
    """
    cin = x.shape[0]
    acc = w[:, 0:1] * x[0:1, :]
    for j in range(1, cin):
        acc = acc + w[:, j:j + 1] * x[j:j + 1, :]
    acc = acc + b
    return jnp.maximum(acc, 0.0) if relu else acc


def _dw3x3_flat(buf_ref, srcs, dwk, mask_l, mask_r, H, W):
    """3x3 depthwise conv, padding=1, stride=1, on a lane-flattened image.

    srcs: list of (c_i, H*W) arrays stacked row-wise into the scratch
          (flat index p = h*W + w lives on the lane axis).
    buf_ref: (C, pad + H*W + pad) VMEM scratch, pad = _halo_pad(W).
    dwk: (C, 9) per-channel taps (BN scale folded), t = kh*3 + kw.
    mask_l / mask_r: (1, H*W) column-validity masks for kw=0 / kw=2
          (row validity is handled by the zero halos).
    Each tap is a static lane-offset read of the scratch; no per-element
    relayout, no (H+2, W+2, C) channel-on-lanes padding.
    """
    HW = H * W
    pad = _halo_pad(W)
    c = buf_ref.shape[0]
    zeros_halo = jnp.zeros((c, pad), jnp.float32)
    # Only the aligned halo tiles are (re)zeroed; re-zeroing each grid step is
    # ~2 vreg stores and avoids the "first-step-per-core" init hazard.
    buf_ref[:, 0:pad] = zeros_halo
    buf_ref[:, pad + HW:pad + HW + pad] = zeros_halo
    r = 0
    for s in srcs:
        buf_ref[r:r + s.shape[0], pad:pad + HW] = s   # 128-lane-aligned store
        r += s.shape[0]

    acc = None
    for kw in range(3):
        col = None
        for kh in range(3):
            t = kh * 3 + kw
            off = pad + (kh - 1) * W + (kw - 1)
            term = buf_ref[:, off:off + HW] * dwk[:, t:t + 1]
            col = term if col is None else col + term
        if kw == 0:
            col = col * mask_l
        elif kw == 2:
            col = col * mask_r
        acc = col if acc is None else acc + col
    return acc


# --------------------------------- kernels ---------------------------------- #

def _bm1_kernel(x_ref, w1_ref, b1_ref, dwk_ref, bdw_ref, w2_ref, b2_ref,
                ml_ref, mr_ref, o_ref, buf_ref, *, H, W, half):
    """benchmodel==1 (stride 1): passthrough first half of the channels,
    branch2 (pw+BN+ReLU -> dw3x3+BN -> pw+BN+ReLU) on the second half,
    concat + channel_shuffle(2) fused as an interleaved channel write."""
    x = x_ref[0]                                   # (Cin, H*W)
    x1 = x[0:half, :]                              # passthrough channels
    x2 = x[half:, :]                               # branch2 input
    y = _pw_fma(w1_ref[...], x2, b1_ref[...], relu=True)
    acc = _dw3x3_flat(buf_ref, [y], dwk_ref[...], ml_ref[...], mr_ref[...], H, W)
    z = acc + bdw_ref[...]
    o2 = _pw_fma(w2_ref[...], z, b2_ref[...], relu=True)
    # channel_shuffle(cat(x1, o2), groups=2): out[2m] = x1[m], out[2m+1] = o2[m]
    for m in range(o2.shape[0]):
        o_ref[0, 2 * m:2 * m + 1, :] = x1[m:m + 1, :]
        o_ref[0, 2 * m + 1:2 * m + 2, :] = o2[m:m + 1, :]


def _bm2_kernel(*refs, H, W, stride):
    """benchmodel==2: branch1 (dw3x3+BN -> pw+BN+ReLU) and branch2
    (pw+BN+ReLU -> dw3x3+BN -> pw+BN+ReLU) share one depthwise pass; the two
    final 1x1 convs are merged into one interleaved weight so the output is
    stored directly in channel_shuffle(cat(b1, b2), 2) order."""
    if stride == 2:
        (x_ref, w1_ref, b1_ref, dwk_ref, bdw_ref, wc_ref, bc_ref,
         ml_ref, mr_ref, sel_ref, o_ref, buf_ref) = refs
    else:
        (x_ref, w1_ref, b1_ref, dwk_ref, bdw_ref, wc_ref, bc_ref,
         ml_ref, mr_ref, o_ref, buf_ref) = refs
        sel_ref = None

    x = x_ref[0]                                             # (Cin, H*W)
    y = _pw_fma(w1_ref[...], x, b1_ref[...], relu=True)      # branch2 pw1
    # One 9-tap pass for both branches: rows [x ; y] with per-channel taps.
    acc = _dw3x3_flat(buf_ref, [x, y], dwk_ref[...],
                      ml_ref[...], mr_ref[...], H, W)
    if stride == 2:
        # Exact 0/1 gather of the stride-2 lattice (tiny (C,HW)x(HW,HW/4)
        # matmul).  HIGHEST keeps the selection bit-accurate; the convs
        # themselves no longer use the MXU at all.
        acc = jnp.dot(acc, sel_ref[...],
                      precision=jax.lax.Precision.HIGHEST,
                      preferred_element_type=jnp.float32)
    z = acc + bdw_ref[...]
    # wc rows are already interleaved (branch1 / branch2) => shuffled output.
    out = _pw_fma(wc_ref[...], z, bc_ref[...], relu=True)
    o_ref[0] = out


# ------------------------------ pallas wrappers ------------------------------ #

def _const_spec(shape):
    nd = len(shape)
    return pl.BlockSpec(shape, lambda n, _nd=nd: (0,) * _nd)


def _run_bm1(x_flat, ops, H, W):
    N, Cin, HW = x_flat.shape
    oup_inc = ops["w2"].shape[0]
    Cout = 2 * oup_inc
    names = ("w1", "b1", "dwk", "bdw", "w2", "b2", "ml", "mr")
    kernel = functools.partial(_bm1_kernel, H=H, W=W, half=Cin // 2)
    return pl.pallas_call(
        kernel,
        out_shape=jax.ShapeDtypeStruct((N, Cout, HW), jnp.float32),
        grid_spec=pltpu.PrefetchScalarGridSpec(
            num_scalar_prefetch=0,
            grid=(N,),
            in_specs=[pl.BlockSpec((1, Cin, HW), lambda n: (n, 0, 0))]
                     + [_const_spec(ops[k].shape) for k in names],
            out_specs=pl.BlockSpec((1, Cout, HW), lambda n: (n, 0, 0)),
            scratch_shapes=[
                pltpu.VMEM((oup_inc, HW + 2 * _halo_pad(W)), jnp.float32)],
        ),
        compiler_params=pltpu.CompilerParams(dimension_semantics=("parallel",)),
    )(x_flat, *[ops[k] for k in names])


def _run_bm2(x_flat, ops, H, W, stride):
    N, Cin, HW = x_flat.shape
    Cout = ops["wc"].shape[0]
    Cdw = ops["dwk"].shape[0]
    HWo = HW // (stride * stride)
    names = ["w1", "b1", "dwk", "bdw", "wc", "bc", "ml", "mr"]
    if stride == 2:
        names.append("sel")
    kernel = functools.partial(_bm2_kernel, H=H, W=W, stride=stride)
    return pl.pallas_call(
        kernel,
        out_shape=jax.ShapeDtypeStruct((N, Cout, HWo), jnp.float32),
        grid_spec=pltpu.PrefetchScalarGridSpec(
            num_scalar_prefetch=0,
            grid=(N,),
            in_specs=[pl.BlockSpec((1, Cin, HW), lambda n: (n, 0, 0))]
                     + [_const_spec(ops[k].shape) for k in names],
            out_specs=pl.BlockSpec((1, Cout, HWo), lambda n: (n, 0, 0)),
            scratch_shapes=[
                pltpu.VMEM((Cdw, HW + 2 * _halo_pad(W)), jnp.float32)],
        ),
        compiler_params=pltpu.CompilerParams(dimension_semantics=("parallel",)),
    )(x_flat, *[ops[k] for k in names])


# --------------------------- params / module wrapper ------------------------- #

def _init_bn(key, c):
    k1, k2, k3, k4 = jax.random.split(key, 4)
    return dict(gamma=1.0 + 0.1 * jax.random.normal(k1, (c,), jnp.float32),
                beta=0.1 * jax.random.normal(k2, (c,), jnp.float32),
                mean=0.1 * jax.random.normal(k3, (c,), jnp.float32),
                var=0.5 + jnp.abs(jax.random.normal(k4, (c,), jnp.float32)))


def _bn_sb(bn, eps=1e-5):
    s = bn["gamma"] / jnp.sqrt(bn["var"] + eps)
    b = bn["beta"] - bn["mean"] * s
    return s, b


def _init_branch2(key, cin, c):
    ks = jax.random.split(key, 6)
    return dict(w1=0.3 * jax.random.normal(ks[0], (c, cin), jnp.float32),
                bn1=_init_bn(ks[1], c),
                dw=0.3 * jax.random.normal(ks[2], (c, 3, 3), jnp.float32),
                bn2=_init_bn(ks[3], c),
                w2=0.3 * jax.random.normal(ks[4], (c, c), jnp.float32),
                bn3=_init_bn(ks[5], c))


def _init_branch1(key, cin, cout):
    ks = jax.random.split(key, 4)
    return dict(dw=0.3 * jax.random.normal(ks[0], (cin, 3, 3), jnp.float32),
                bn1=_init_bn(ks[1], cin),
                w=0.3 * jax.random.normal(ks[2], (cout, cin), jnp.float32),
                bn2=_init_bn(ks[3], cout))


def _col_masks(H, W):
    col = np.arange(H * W) % W
    ml = (col != 0).astype(np.float32).reshape(1, H * W)
    mr = (col != W - 1).astype(np.float32).reshape(1, H * W)
    return jnp.asarray(ml), jnp.asarray(mr)


def _stride2_select(H, W):
    Ho, Wo = H // 2, W // 2
    sel = np.zeros((H * W, Ho * Wo), np.float32)
    ho, wo = np.meshgrid(np.arange(Ho), np.arange(Wo), indexing="ij")
    sel[((2 * ho) * W + 2 * wo).ravel(), (ho * Wo + wo).ravel()] = 1.0
    return jnp.asarray(sel)


class InvertedResidualPallas:
    def __init__(self, inp, oup, stride, benchmodel, key):
        assert stride in (1, 2)
        assert benchmodel in (1, 2)
        self.inp, self.oup = inp, oup
        self.stride, self.benchmodel = stride, benchmodel
        oup_inc = oup // 2
        k1, k2 = jax.random.split(key)
        if benchmodel == 1:
            assert inp == oup and stride == 1  # ShuffleNetV2 basic unit
            self.p1 = None
            self.p2 = _init_branch2(k2, inp - inp // 2, oup_inc)
        else:
            self.p1 = _init_branch1(k1, inp, oup_inc)
            self.p2 = _init_branch2(k2, inp, oup_inc)

    # ---- fold BN scales into weights, build per-(H,W) kernel operands ---- #
    def _ops_bm1(self, H, W):
        p = self.p2
        s1, b1 = _bn_sb(p["bn1"])
        s2, b2 = _bn_sb(p["bn2"])
        s3, b3 = _bn_sb(p["bn3"])
        ml, mr = _col_masks(H, W)
        return dict(w1=p["w1"] * s1[:, None], b1=b1[:, None],
                    dwk=(p["dw"] * s2[:, None, None]).reshape(-1, 9),
                    bdw=b2[:, None],
                    w2=p["w2"] * s3[:, None], b2=b3[:, None],
                    ml=ml, mr=mr)

    def _ops_bm2(self, H, W):
        p1, p2 = self.p1, self.p2
        sa, ba = _bn_sb(p1["bn1"])
        sb, bb = _bn_sb(p1["bn2"])
        s1, b1 = _bn_sb(p2["bn1"])
        s2, b2 = _bn_sb(p2["bn2"])
        s3, b3 = _bn_sb(p2["bn3"])
        dwk = jnp.concatenate([p1["dw"] * sa[:, None, None],
                               p2["dw"] * s2[:, None, None]],
                              axis=0).reshape(-1, 9)
        bdw = jnp.concatenate([ba, b2], axis=0)[:, None]
        wb_s = p1["w"] * sb[:, None]            # (oup_inc, inp)
        w2_s = p2["w2"] * s3[:, None]           # (oup_inc, oup_inc)
        oup_inc, inp = wb_s.shape
        # Interleave branch1/branch2 rows => output comes out channel-shuffled.
        wc = jnp.stack(
            [jnp.concatenate([wb_s, jnp.zeros((oup_inc, w2_s.shape[1]),
                                              jnp.float32)], axis=1),
             jnp.concatenate([jnp.zeros((oup_inc, inp), jnp.float32), w2_s],
                             axis=1)],
            axis=1).reshape(2 * oup_inc, inp + w2_s.shape[1])
        bc = jnp.stack([bb, b3], axis=1).reshape(-1)[:, None]
        ml, mr = _col_masks(H, W)
        ops = dict(w1=p2["w1"] * s1[:, None], b1=b1[:, None],
                   dwk=dwk, bdw=bdw, wc=wc, bc=bc, ml=ml, mr=mr)
        if self.stride == 2:
            ops["sel"] = _stride2_select(H, W)
        return ops

    def __call__(self, x_nchw):
        N, C, H, W = x_nchw.shape
        assert C == self.inp
        if self.stride == 2:
            # stride-2 output size = H//2 only for even H, W (matches test).
            assert H % 2 == 0 and W % 2 == 0
        Ho, Wo = H // self.stride, W // self.stride
        x_flat = x_nchw.reshape(N, C, H * W)            # free reshape
        if self.benchmodel == 1:
            out = _run_bm1(x_flat, self._ops_bm1(H, W), H, W)
        else:
            out = _run_bm2(x_flat, self._ops_bm2(H, W), H, W, self.stride)
        return out.reshape(N, self.oup, Ho, Wo)         # free reshape (NCHW)

    # ---- pure-JAX (lax.conv) reference for validation ---- #
    def reference(self, x):
        if self.benchmodel == 1:
            half = x.shape[1] // 2
            out = jnp.concatenate(
                [x[:, :half], _ref_branch2(x[:, half:], self.p2, self.stride)],
                axis=1)
        else:
            out = jnp.concatenate(
                [_ref_branch1(x, self.p1, self.stride),
                 _ref_branch2(x, self.p2, self.stride)], axis=1)
        n, c, h, w = out.shape
        return out.reshape(n, 2, c // 2, h, w).transpose(0, 2, 1, 3, 4) \
                  .reshape(n, c, h, w)


# ------------------------------- JAX reference ------------------------------- #

_HIGH = jax.lax.Precision.HIGHEST


def _ref_pw(x, w, s, b, relu):
    y = lax.conv_general_dilated(
        x, w[:, :, None, None], (1, 1), "VALID",
        dimension_numbers=("NCHW", "OIHW", "NCHW"), precision=_HIGH)
    y = y * s[None, :, None, None] + b[None, :, None, None]
    return jnp.maximum(y, 0.0) if relu else y


def _ref_dw(x, dw, s, b, stride):
    c = dw.shape[0]
    y = lax.conv_general_dilated(
        x, dw[:, None, :, :], (stride, stride), ((1, 1), (1, 1)),
        dimension_numbers=("NCHW", "OIHW", "NCHW"),
        feature_group_count=c, precision=_HIGH)
    return y * s[None, :, None, None] + b[None, :, None, None]


def _ref_branch2(x, p, stride):
    s1, b1 = _bn_sb(p["bn1"])
    s2, b2 = _bn_sb(p["bn2"])
    s3, b3 = _bn_sb(p["bn3"])
    y = _ref_pw(x, p["w1"], s1, b1, True)
    y = _ref_dw(y, p["dw"], s2, b2, stride)
    return _ref_pw(y, p["w2"], s3, b3, True)


def _ref_branch1(x, p, stride):
    s1, b1 = _bn_sb(p["bn1"])
    s2, b2 = _bn_sb(p["bn2"])
    y = _ref_dw(x, p["dw"], s1, b1, stride)
    return _ref_pw(y, p["w"], s2, b2, True)


# ----------------------------------- main ------------------------------------ #

if __name__ == "__main__":
    key = jax.random.PRNGKey(0)
    kx1, kx2, km1, km2 = jax.random.split(key, 4)

    # benchmodel=1, stride=1: inp == oup == 4, x: (2, 4, 16, 16) NCHW.
    x1 = jax.random.normal(kx1, (2, 4, 16, 16), jnp.float32)
    mod1 = InvertedResidualPallas(inp=4, oup=4, stride=1, benchmodel=1, key=km1)
    out1 = jax.block_until_ready(mod1(x1))
    ref1 = mod1.reference(x1)
    assert out1.shape == (2, 4, 16, 16), out1.shape
    assert jnp.allclose(out1, ref1, atol=1e-3, rtol=1e-3), \
        float(jnp.max(jnp.abs(out1 - ref1)))

    # benchmodel=2, stride=2 (downsampling unit): inp=4, oup=8, x: (2, 4, 16, 16).
    x2 = jax.random.normal(kx2, (2, 4, 16, 16), jnp.float32)
    mod2 = InvertedResidualPallas(inp=4, oup=8, stride=2, benchmodel=2, key=km2)
    out2 = jax.block_until_ready(mod2(x2))
    ref2 = mod2.reference(x2)
    assert out2.shape == (2, 8, 8, 8), out2.shape
    assert jnp.allclose(out2, ref2, atol=1e-3, rtol=1e-3), \
        float(jnp.max(jnp.abs(out2 - ref2)))

    print("KERNEL_OK")
</pallas_src>

<mosaic_0001>
module attributes {stable_mosaic.version = 11 : i64} {
  func.func @_bm1_kernel(%arg0: i32, %arg1: memref<1x4x256xf32, #tpu.memory_space<vmem>>, %arg2: memref<2x2xf32, #tpu.memory_space<vmem>>, %arg3: memref<2x1xf32, #tpu.memory_space<vmem>>, %arg4: memref<2x9xf32, #tpu.memory_space<vmem>>, %arg5: memref<2x1xf32, #tpu.memory_space<vmem>>, %arg6: memref<2x2xf32, #tpu.memory_space<vmem>>, %arg7: memref<2x1xf32, #tpu.memory_space<vmem>>, %arg8: memref<1x256xf32, #tpu.memory_space<vmem>>, %arg9: memref<1x256xf32, #tpu.memory_space<vmem>>, %arg10: memref<1x4x256xf32, #tpu.memory_space<vmem>>, %arg11: memref<2x512xf32, #tpu.memory_space<vmem>>) attributes {dimension_semantics = [#tpu.dimension_semantics<parallel>], iteration_bounds = array<i64: 2>, scalar_prefetch = 0 : i64, scratch_operands = 1 : i64, tpu.core_type = #tpu.core_type<tc>, window_params = [{transform_indices = @transform_0, window_bounds = array<i64: 1, 4, 256>}, {pipeline_mode = #tpu.pipeline_mode<synchronous>, transform_indices = @transform_1, window_bounds = array<i64: 2, 2>}, {pipeline_mode = #tpu.pipeline_mode<synchronous>, transform_indices = @transform_2, window_bounds = array<i64: 2, 1>}, {pipeline_mode = #tpu.pipeline_mode<synchronous>, transform_indices = @transform_3, window_bounds = array<i64: 2, 9>}, {pipeline_mode = #tpu.pipeline_mode<synchronous>, transform_indices = @transform_4, window_bounds = array<i64: 2, 1>}, {pipeline_mode = #tpu.pipeline_mode<synchronous>, transform_indices = @transform_5, window_bounds = array<i64: 2, 2>}, {pipeline_mode = #tpu.pipeline_mode<synchronous>, transform_indices = @transform_6, window_bounds = array<i64: 2, 1>}, {pipeline_mode = #tpu.pipeline_mode<synchronous>, transform_indices = @transform_7, window_bounds = array<i64: 1, 256>}, {pipeline_mode = #tpu.pipeline_mode<synchronous>, transform_indices = @transform_8, window_bounds = array<i64: 1, 256>}, {transform_indices = @transform_9, window_bounds = array<i64: 1, 4, 256>}]} {
    %c0 = arith.constant 0 : index
    %c0_0 = arith.constant 0 : index
    %c0_1 = arith.constant 0 : index
    %0 = vector.load %arg1[%c0, %c0_0, %c0_1] : memref<1x4x256xf32, #tpu.memory_space<vmem>>, vector<1x4x256xf32>
    %1 = vector.shape_cast %0 : vector<1x4x256xf32> to vector<4x256xf32>
    %2 = vector.extract_strided_slice %1 {offsets = [0, 0], sizes = [2, 256], strides = [1, 1]} : vector<4x256xf32> to vector<2x256xf32>
    %3 = vector.extract_strided_slice %1 {offsets = [2, 0], sizes = [2, 256], strides = [1, 1]} : vector<4x256xf32> to vector<2x256xf32>
    %c0_2 = arith.constant 0 : index
    %c0_3 = arith.constant 0 : index
    %4 = vector.load %arg2[%c0_2, %c0_3] : memref<2x2xf32, #tpu.memory_space<vmem>>, vector<2x2xf32>
    %c0_4 = arith.constant 0 : index
    %c0_5 = arith.constant 0 : index
    %5 = vector.load %arg3[%c0_4, %c0_5] : memref<2x1xf32, #tpu.memory_space<vmem>>, vector<2x1xf32>
    %6 = vector.extract_strided_slice %4 {offsets = [0, 0], sizes = [2, 1], strides = [1, 1]} : vector<2x2xf32> to vector<2x1xf32>
    %7 = vector.extract_strided_slice %3 {offsets = [0, 0], sizes = [1, 256], strides = [1, 1]} : vector<2x256xf32> to vector<1x256xf32>
    %8 = vector.broadcast %6 : vector<2x1xf32> to vector<2x256xf32>
    %9 = vector.broadcast %7 : vector<1x256xf32> to vector<2x256xf32>
    %10 = arith.mulf %8, %9 : vector<2x256xf32>
    %11 = vector.extract_strided_slice %4 {offsets = [0, 1], sizes = [2, 1], strides = [1, 1]} : vector<2x2xf32> to vector<2x1xf32>
    %12 = vector.extract_strided_slice %3 {offsets = [1, 0], sizes = [1, 256], strides = [1, 1]} : vector<2x256xf32> to vector<1x256xf32>
    %13 = vector.broadcast %11 : vector<2x1xf32> to vector<2x256xf32>
    %14 = vector.broadcast %12 : vector<1x256xf32> to vector<2x256xf32>
    %15 = arith.mulf %13, %14 : vector<2x256xf32>
    %16 = arith.addf %10, %15 : vector<2x256xf32>
    %17 = vector.broadcast %5 : vector<2x1xf32> to vector<2x256xf32>
    %18 = arith.addf %16, %17 : vector<2x256xf32>
    %cst = arith.constant 0.000000e+00 : f32
    %19 = vector.broadcast %cst : f32 to vector<2x256xf32>
    %20 = arith.maximumf %18, %19 : vector<2x256xf32>
    %c0_6 = arith.constant 0 : index
    %c0_7 = arith.constant 0 : index
    %21 = vector.load %arg4[%c0_6, %c0_7] : memref<2x9xf32, #tpu.memory_space<vmem>>, vector<2x9xf32>
    %c0_8 = arith.constant 0 : index
    %c0_9 = arith.constant 0 : index
    %22 = vector.load %arg8[%c0_8, %c0_9] : memref<1x256xf32, #tpu.memory_space<vmem>>, vector<1x256xf32>
    %c0_10 = arith.constant 0 : index
    %c0_11 = arith.constant 0 : index
    %23 = vector.load %arg9[%c0_10, %c0_11] : memref<1x256xf32, #tpu.memory_space<vmem>>, vector<1x256xf32>
    %cst_12 = arith.constant 0.000000e+00 : f32
    %24 = vector.broadcast %cst_12 : f32 to vector<2x128xf32>
    %c0_13 = arith.constant 0 : index
    %c0_14 = arith.constant 0 : index
    %25 = vector.load %arg11[%c0_13, %c0_14] : memref<2x512xf32, #tpu.memory_space<vmem>>, vector<2x128xf32>
    tpu.vector_store %arg11[%c0_13, %c0_14], %24 {strides = array<i32>} : memref<2x512xf32, #tpu.memory_space<vmem>>, vector<2x128xf32>,
    %c0_15 = arith.constant 0 : index
    %c384 = arith.constant 384 : index
    %26 = vector.load %arg11[%c0_15, %c384] : memref<2x512xf32, #tpu.memory_space<vmem>>, vector<2x128xf32>
    tpu.vector_store %arg11[%c0_15, %c384], %24 {strides = array<i32>} : memref<2x512xf32, #tpu.memory_space<vmem>>, vector<2x128xf32>,
    %c0_16 = arith.constant 0 : index
    %c128 = arith.constant 128 : index
    %27 = vector.load %arg11[%c0_16, %c128] : memref<2x512xf32, #tpu.memory_space<vmem>>, vector<2x256xf32>
    tpu.vector_store %arg11[%c0_16, %c128], %20 {strides = array<i32>} : memref<2x512xf32, #tpu.memory_space<vmem>>, vector<2x256xf32>,
    %c0_17 = arith.constant 0 : index
    %c111 = arith.constant 111 : index
    %28 = vector.load %arg11[%c0_17, %c111] : memref<2x512xf32, #tpu.memory_space<vmem>>, vector<2x256xf32>
    %29 = vector.extract_strided_slice %21 {offsets = [0, 0], sizes = [2, 1], strides = [1, 1]} : vector<2x9xf32> to vector<2x1xf32>
    %30 = vector.broadcast %29 : vector<2x1xf32> to vector<2x256xf32>
    %31 = arith.mulf %28, %30 : vector<2x256xf32>
    %c0_18 = arith.constant 0 : index
    %c127 = arith.constant 127 : index
    %32 = vector.load %arg11[%c0_18, %c127] : memref<2x512xf32, #tpu.memory_space<vmem>>, vector<2x256xf32>
    %33 = vector.extract_strided_slice %21 {offsets = [0, 3], sizes = [2, 1], strides = [1, 1]} : vector<2x9xf32> to vector<2x1xf32>
    %34 = vector.broadcast %33 : vector<2x1xf32> to vector<2x256xf32>
    %35 = arith.mulf %32, %34 : vector<2x256xf32>
    %36 = arith.addf %31, %35 : vector<2x256xf32>
    %c0_19 = arith.constant 0 : index
    %c143 = arith.constant 143 : index
    %37 = vector.load %arg11[%c0_19, %c143] : memref<2x512xf32, #tpu.memory_space<vmem>>, vector<2x256xf32>
    %38 = vector.extract_strided_slice %21 {offsets = [0, 6], sizes = [2, 1], strides = [1, 1]} : vector<2x9xf32> to vector<2x1xf32>
    %39 = vector.broadcast %38 : vector<2x1xf32> to vector<2x256xf32>
    %40 = arith.mulf %37, %39 : vector<2x256xf32>
    %41 = arith.addf %36, %40 : vector<2x256xf32>
    %42 = vector.broadcast %22 : vector<1x256xf32> to vector<2x256xf32>
    %43 = arith.mulf %41, %42 : vector<2x256xf32>
    %c0_20 = arith.constant 0 : index
    %c112 = arith.constant 112 : index
    %44 = vector.load %arg11[%c0_20, %c112] : memref<2x512xf32, #tpu.memory_space<vmem>>, vector<2x256xf32>
    %45 = vector.extract_strided_slice %21 {offsets = [0, 1], sizes = [2, 1], strides = [1, 1]} : vector<2x9xf32> to vector<2x1xf32>
    %46 = vector.broadcast %45 : vector<2x1xf32> to vector<2x256xf32>
    %47 = arith.mulf %44, %46 : vector<2x256xf32>
    %c0_21 = arith.constant 0 : index
    %c128_22 = arith.constant 128 : index
    %48 = vector.load %arg11[%c0_21, %c128_22] : memref<2x512xf32, #tpu.memory_space<vmem>>, vector<2x256xf32>
    %49 = vector.extract_strided_slice %21 {offsets = [0, 4], sizes = [2, 1], strides = [1, 1]} : vector<2x9xf32> to vector<2x1xf32>
    %50 = vector.broadcast %49 : vector<2x1xf32> to vector<2x256xf32>
    %51 = arith.mulf %48, %50 : vector<2x256xf32>
    %52 = arith.addf %47, %51 : vector<2x256xf32>
    %c0_23 = arith.constant 0 : index
    %c144 = arith.constant 144 : index
    %53 = vector.load %arg11[%c0_23, %c144] : memref<2x512xf32, #tpu.memory_space<vmem>>, vector<2x256xf32>
    %54 = vector.extract_strided_slice %21 {offsets = [0, 7], sizes = [2, 1], strides = [1, 1]} : vector<2x9xf32> to vector<2x1xf32>
    %55 = vector.broadcast %54 : vector<2x1xf32> to vector<2x256xf32>
    %56 = arith.mulf %53, %55 : vector<2x256xf32>
    %57 = arith.addf %52, %56 : vector<2x256xf32>
    %58 = arith.addf %43, %57 : vector<2x256xf32>
    %c0_24 = arith.constant 0 : index
    %c113 = arith.constant 113 : index
    %59 = vector.load %arg11[%c0_24, %c113] : memref<2x512xf32, #tpu.memory_space<vmem>>, vector<2x256xf32>
    %60 = vector.extract_strided_slice %21 {offsets = [0, 2], sizes = [2, 1], strides = [1, 1]} : vector<2x9xf32> to vector<2x1xf32>
    %61 = vector.broadcast %60 : vector<2x1xf32> to vector<2x256xf32>
    %62 = arith.mulf %59, %61 : vector<2x256xf32>
    %c0_25 = arith.constant 0 : index
    %c129 = arith.constant 129 : index
    %63 = vector.load %arg11[%c0_25, %c129] : memref<2x512xf32, #tpu.memory_space<vmem>>, vector<2x256xf32>
    %64 = vector.extract_strided_slice %21 {offsets = [0, 5], sizes = [2, 1], strides = [1, 1]} : vector<2x9xf32> to vector<2x1xf32>
    %65 = vector.broadcast %64 : vector<2x1xf32> to vector<2x256xf32>
    %66 = arith.mulf %63, %65 : vector<2x256xf32>
    %67 = arith.addf %62, %66 : vector<2x256xf32>
    %c0_26 = arith.constant 0 : index
    %c145 = arith.constant 145 : index
    %68 = vector.load %arg11[%c0_26, %c145] : memref<2x512xf32, #tpu.memory_space<vmem>>, vector<2x256xf32>
    %69 = vector.extract_strided_slice %21 {offsets = [0, 8], sizes = [2, 1], strides = [1, 1]} : vector<2x9xf32> to vector<2x1xf32>
    %70 = vector.broadcast %69 : vector<2x1xf32> to vector<2x256xf32>
    %71 = arith.mulf %68, %70 : vector<2x256xf32>
    %72 = arith.addf %67, %71 : vector<2x256xf32>
    %73 = vector.broadcast %23 : vector<1x256xf32> to vector<2x256xf32>
    %74 = arith.mulf %72, %73 : vector<2x256xf32>
    %75 = arith.addf %58, %74 : vector<2x256xf32>
    %c0_27 = arith.constant 0 : index
    %c0_28 = arith.constant 0 : index
    %76 = vector.load %arg5[%c0_27, %c0_28] : memref<2x1xf32, #tpu.memory_space<vmem>>, vector<2x1xf32>
    %77 = vector.broadcast %76 : vector<2x1xf32> to vector<2x256xf32>
    %78 = arith.addf %75, %77 : vector<2x256xf32>
    %c0_29 = arith.constant 0 : index
    %c0_30 = arith.constant 0 : index
    %79 = vector.load %arg6[%c0_29, %c0_30] : memref<2x2xf32, #tpu.memory_space<vmem>>, vector<2x2xf32>
    %c0_31 = arith.constant 0 : index
    %c0_32 = arith.constant 0 : index
    %80 = vector.load %arg7[%c0_31, %c0_32] : memref<2x1xf32, #tpu.memory_space<vmem>>, vector<2x1xf32>
    %81 = vector.extract_strided_slice %79 {offsets = [0, 0], sizes = [2, 1], strides = [1, 1]} : vector<2x2xf32> to vector<2x1xf32>
    %82 = vector.extract_strided_slice %78 {offsets = [0, 0], sizes = [1, 256], strides = [1, 1]} : vector<2x256xf32> to vector<1x256xf32>
    %83 = vector.broadcast %81 : vector<2x1xf32> to vector<2x256xf32>
    %84 = vector.broadcast %82 : vector<1x256xf32> to vector<2x256xf32>
    %85 = arith.mulf %83, %84 : vector<2x256xf32>
    %86 = vector.extract_strided_slice %79 {offsets = [0, 1], sizes = [2, 1], strides = [1, 1]} : vector<2x2xf32> to vector<2x1xf32>
    %87 = vector.extract_strided_slice %78 {offsets = [1, 0], sizes = [1, 256], strides = [1, 1]} : vector<2x256xf32> to vector<1x256xf32>
    %88 = vector.broadcast %86 : vector<2x1xf32> to vector<2x256xf32>
    %89 = vector.broadcast %87 : vector<1x256xf32> to vector<2x256xf32>
    %90 = arith.mulf %88, %89 : vector<2x256xf32>
    %91 = arith.addf %85, %90 : vector<2x256xf32>
    %92 = vector.broadcast %80 : vector<2x1xf32> to vector<2x256xf32>
    %93 = arith.addf %91, %92 : vector<2x256xf32>
    %cst_33 = arith.constant 0.000000e+00 : f32
    %94 = vector.broadcast %cst_33 : f32 to vector<2x256xf32>
    %95 = arith.maximumf %93, %94 : vector<2x256xf32>
    %96 = vector.extract_strided_slice %2 {offsets = [0, 0], sizes = [1, 256], strides = [1, 1]} : vector<2x256xf32> to vector<1x256xf32>
    %c0_34 = arith.constant 0 : index
    %c0_35 = arith.constant 0 : index
    %c0_36 = arith.constant 0 : index
    %97 = vector.load %arg10[%c0_34, %c0_35, %c0_36] : memref<1x4x256xf32, #tpu.memory_space<vmem>>, vector<1x1x256xf32>
    %98 = vector.shape_cast %97 : vector<1x1x256xf32> to vector<1x256xf32>
    %99 = vector.shape_cast %96 : vector<1x256xf32> to vector<1x1x256xf32>
    tpu.vector_store %arg10[%c0_34, %c0_35, %c0_36], %99 {strides = array<i32>} : memref<1x4x256xf32, #tpu.memory_space<vmem>>, vector<1x1x256xf32>,
    %100 = vector.extract_strided_slice %95 {offsets = [0, 0], sizes = [1, 256], strides = [1, 1]} : vector<2x256xf32> to vector<1x256xf32>
    %c0_37 = arith.constant 0 : index
    %c1 = arith.constant 1 : index
    %c0_38 = arith.constant 0 : index
    %101 = vector.load %arg10[%c0_37, %c1, %c0_38] : memref<1x4x256xf32, #tpu.memory_space<vmem>>, vector<1x1x256xf32>
    %102 = vector.shape_cast %101 : vector<1x1x256xf32> to vector<1x256xf32>
    %103 = vector.shape_cast %100 : vector<1x256xf32> to vector<1x1x256xf32>
    tpu.vector_store %arg10[%c0_37, %c1, %c0_38], %103 {strides = array<i32>} : memref<1x4x256xf32, #tpu.memory_space<vmem>>, vector<1x1x256xf32>,
    %104 = vector.extract_strided_slice %2 {offsets = [1, 0], sizes = [1, 256], strides = [1, 1]} : vector<2x256xf32> to vector<1x256xf32>
    %c0_39 = arith.constant 0 : index
    %c2 = arith.constant 2 : index
    %c0_40 = arith.constant 0 : index
    %105 = vector.load %arg10[%c0_39, %c2, %c0_40] : memref<1x4x256xf32, #tpu.memory_space<vmem>>, vector<1x1x256xf32>
    %106 = vector.shape_cast %105 : vector<1x1x256xf32> to vector<1x256xf32>
    %107 = vector.shape_cast %104 : vector<1x256xf32> to vector<1x1x256xf32>
    tpu.vector_store %arg10[%c0_39, %c2, %c0_40], %107 {strides = array<i32>} : memref<1x4x256xf32, #tpu.memory_space<vmem>>, vector<1x1x256xf32>,
    %108 = vector.extract_strided_slice %95 {offsets = [1, 0], sizes = [1, 256], strides = [1, 1]} : vector<2x256xf32> to vector<1x256xf32>
    %c0_41 = arith.constant 0 : index
    %c3 = arith.constant 3 : index
    %c0_42 = arith.constant 0 : index
    %109 = vector.load %arg10[%c0_41, %c3, %c0_42] : memref<1x4x256xf32, #tpu.memory_space<vmem>>, vector<1x1x256xf32>
    %110 = vector.shape_cast %109 : vector<1x1x256xf32> to vector<1x256xf32>
    %111 = vector.shape_cast %108 : vector<1x256xf32> to vector<1x1x256xf32>
    tpu.vector_store %arg10[%c0_41, %c3, %c0_42], %111 {strides = array<i32>} : memref<1x4x256xf32, #tpu.memory_space<vmem>>, vector<1x1x256xf32>,
    return
  }
  func.func @transform_0(%arg0: i32) -> (i32, i32, i32) {
    %c0_i32 = arith.constant 0 : i32
    %c0_i32_0 = arith.constant 0 : i32
    %c0_i32_1 = arith.constant 0 : i32
    return %arg0, %c0_i32, %c0_i32_0 : i32, i32, i32
  }
  func.func @transform_1(%arg0: i32) -> (i32, i32) {
    %c0_i32 = arith.constant 0 : i32
    %c0_i32_0 = arith.constant 0 : i32
    %c0_i32_1 = arith.constant 0 : i32
    return %c0_i32, %c0_i32_0 : i32, i32
  }
  func.func @transform_2(%arg0: i32) -> (i32, i32) {
    %c0_i32 = arith.constant 0 : i32
    %c0_i32_0 = arith.constant 0 : i32
    %c0_i32_1 = arith.constant 0 : i32
    return %c0_i32, %c0_i32_0 : i32, i32
  }
  func.func @transform_3(%arg0: i32) -> (i32, i32) {
    %c0_i32 = arith.constant 0 : i32
    %c0_i32_0 = arith.constant 0 : i32
    %c0_i32_1 = arith.constant 0 : i32
    return %c0_i32, %c0_i32_0 : i32, i32
  }
  func.func @transform_4(%arg0: i32) -> (i32, i32) {
    %c0_i32 = arith.constant 0 : i32
    %c0_i32_0 = arith.constant 0 : i32
    %c0_i32_1 = arith.constant 0 : i32
    return %c0_i32, %c0_i32_0 : i32, i32
  }
  func.func @transform_5(%arg0: i32) -> (i32, i32) {
    %c0_i32 = arith.constant 0 : i32
    %c0_i32_0 = arith.constant 0 : i32
    %c0_i32_1 = arith.constant 0 : i32
    return %c0_i32, %c0_i32_0 : i32, i32
  }
  func.func @transform_6(%arg0: i32) -> (i32, i32) {
    %c0_i32 = arith.constant 0 : i32
    %c0_i32_0 = arith.constant 0 : i32
    %c0_i32_1 = arith.constant 0 : i32
    return %c0_i32, %c0_i32_0 : i32, i32
  }
  func.func @transform_7(%arg0: i32) -> (i32, i32) {
    %c0_i32 = arith.constant 0 : i32
    %c0_i32_0 = arith.constant 0 : i32
    %c0_i32_1 = arith.constant 0 : i32
    return %c0_i32, %c0_i32_0 : i32, i32
  }
  func.func @transform_8(%arg0: i32) -> (i32, i32) {
    %c0_i32 = arith.constant 0 : i32
    %c0_i32_0 = arith.constant 0 : i32
    %c0_i32_1 = arith.constant 0 : i32
    return %c0_i32, %c0_i32_0 : i32, i32
  }
  func.func @transform_9(%arg0: i32) -> (i32, i32, i32) {
    %c0_i32 = arith.constant 0 : i32
    %c0_i32_0 = arith.constant 0 : i32
    %c0_i32_1 = arith.constant 0 : i32
    return %arg0, %c0_i32, %c0_i32_0 : i32, i32, i32
  }
}

</mosaic_0001>

<llo_original>
// kernel: tpu_custom_call.1
$region0: #{tpu_custom_call.1}
  #allocation0 [shape = 'u32[]', space=smem, size = 0x4, offset = 0x4, fixed_abs, tag = 'smem constant byte address 0x4 - core index']
  #allocation1 [shape = 'u32[144,128]{1,0:T(1,128)}', space=vmem, size = 0x12000, scoped, tag = 'internal scratch']
  #allocation2 [shape = 'f32[2,512]{1,0:T(2,128)}', space=vmem, size = 0x1000, scoped, tag = 'scratch operand']
  %s0 = inlined_call_operand.hbm [shape: f32[2,4,256], index: 0, kind: input, shape index: {}]
  %s1 = inlined_call_operand.vmem [shape: f32[2,2], index: 1, kind: input, shape index: {}]
  %s2 = inlined_call_operand.vmem [shape: f32[2,1], index: 2, kind: input, shape index: {}]
  %s3 = inlined_call_operand.vmem [shape: f32[2,9], index: 3, kind: input, shape index: {}]
  %s4 = inlined_call_operand.vmem [shape: f32[2,1], index: 4, kind: input, shape index: {}]
  %s5 = inlined_call_operand.vmem [shape: f32[2,2], index: 5, kind: input, shape index: {}]
  %s6 = inlined_call_operand.vmem [shape: f32[2,1], index: 6, kind: input, shape index: {}]
  %s7 = inlined_call_operand.vmem [shape: f32[1,256], index: 7, kind: input, shape index: {}]
  %s8 = inlined_call_operand.vmem [shape: f32[1,256], index: 8, kind: input, shape index: {}]
  %s9 = inlined_call_operand.hbm [shape: f32[2,4,256], index: 9, kind: output, shape index: {}]
  %s10 = sld [smem:[#allocation0]]
  $region73: #{tpu_custom_call.1} parent=0
    _
  %s12 = ssub.s32 1, %s10
  %s13 = scalar_select 0, %s12, %s10
  $region1: #{tpu_custom_call.1} parent=0
    #allocation3 [shape = 'u8[8192]{0}', space=vmem, size = 0x2000, scoped, tag = 'input window, operand 0']
    #allocation4 [shape = 's32[2]{0}', space=sflag, size = 0x8, scoped, tag = 'scoped memory for tpu_custom_call.1']
    #allocation5 [shape = 's32[2]{0}', space=sflag, size = 0x8, scoped, tag = 'scoped memory for tpu_custom_call.1']
    #allocation6 [shape = 'u8[8192]{0}', space=vmem, size = 0x2000, scoped, tag = 'output window, operand 0']
    %14 = vsyncpa [#allocation4], 0
    %s15 = scalar_lea.sflag [#allocation4], 1
    %16 = vsyncpa %s15, 0
    %17 = vsyncpa [#allocation5], 0
    %s18 = scalar_lea.sflag [#allocation5], 1
    %19 = vsyncpa %s18, 0
    loop: start=0, step=1, limit=4
    $region2: #{tpu_custom_call.1} parent=1 // loop_pre_header
      _
    $region3: #{tpu_custom_call.1} parent=1 // loop_header
      %s21 = sphi 0, %s25
      %p22 = scmp.ge.s32.totalorder %s21, 4
      %s31 = sphi 0, %s33
      %s34 = sphi 0, %s31
      %s35 = sphi 0, %s34
      %s51 = sphi 0, %s35
      %s55 = sphi 0, %s55
      %s57 = sphi 0, %s55
      %s58 = sphi 0, %s57
      %s72 = sphi 0, %s58
      %s76 = sphi 0, %s76
      %s78 = sphi 0, %s76
      %s79 = sphi 0, %s78
      %s93 = sphi 0, %s79
      %s97 = sphi 0, %s97
      %s99 = sphi 0, %s97
      %s100 = sphi 0, %s99
      %s114 = sphi 0, %s100
      %s118 = sphi 0, %s118
      %s120 = sphi 0, %s118
      %s121 = sphi 0, %s120
      %s135 = sphi 0, %s121
      %s139 = sphi 0, %s139
      %s141 = sphi 0, %s139
      %s142 = sphi 0, %s141
      %s156 = sphi 0, %s142
      %s160 = sphi 0, %s160
      %s162 = sphi 0, %s160
      %s163 = sphi 0, %s162
      %s177 = sphi 0, %s163
      %s181 = sphi 0, %s181
      %s183 = sphi 0, %s181
      %s184 = sphi 0, %s183
      %s198 = sphi 0, %s184
      %s202 = sphi 0, %s202
      %s204 = sphi 0, %s202
      %s205 = sphi 0, %s204
      %s219 = sphi 0, %s205
      %s225 = sphi 0, %s227
      %s228 = sphi 0, %s225
      %s229 = sphi 0, %s228
      %s245 = sphi 0, %s229
    $region4: #{tpu_custom_call.1} parent=1 // loop_header_branch
      %24 = sbr.rel (%p22) target = $region8
    $region5: #{tpu_custom_call.1} parent=1 // loop_body
      %s26 = ssub.s32 %s21, 1
      %s27 = ssub.s32 %s21, 2
      %s28 = sadd.s32 %s21, 1
      %s29 = ssub.s32 %s21, %s28
      %p30 = scmp.eq.s32.totalorder %s29, 0
      %s32 = sadd.s32 %s31, 1
      %s33 = scalar_select %p30, %s31, %s32
      %p36 = pneg %p30
      %p37 = scmp.eq.s32.totalorder %s21, 1
      %p38 = por %p36, %p37
      %p39 = scmp.ne.s32.totalorder %s31, %s34
      %p40 = scmp.eq.s32.totalorder %s21, 0
      %p41 = por %p39, %p40
      %p42 = scmp.ne.s32.totalorder %s31, %s34
      %p43 = scmp.eq.s32.totalorder %s26, 1
      %p44 = por %p42, %p43
      %p45 = scmp.ne.s32.totalorder %s34, %s35
      %p46 = scmp.eq.s32.totalorder %s26, 0
      %p47 = por %p45, %p46
      %p48 = scmp.ne.s32.totalorder %s34, %s35
      %p49 = scmp.eq.s32.totalorder %s27, 1
      %p50 = por %p48, %p49
      %p52 = scmp.ne.s32.totalorder %s35, %s51
      %p53 = scmp.eq.s32.totalorder %s27, 0
      %p54 = por %p52, %p53
      %s56 = sadd.s32 %s55, 1
      %p59 = scmp.eq.s32.totalorder %s21, 1
      %p60 = scmp.ne.s32.totalorder %s55, %s57
      %p61 = scmp.eq.s32.totalorder %s21, 0
      %p62 = por %p60, %p61
      %p63 = scmp.ne.s32.totalorder %s55, %s57
      %p64 = scmp.eq.s32.totalorder %s26, 1
      %p65 = por %p63, %p64
      %p66 = scmp.ne.s32.totalorder %s57, %s58
      %p67 = scmp.eq.s32.totalorder %s26, 0
      %p68 = por %p66, %p67
      %p69 = scmp.ne.s32.totalorder %s57, %s58
      %p70 = scmp.eq.s32.totalorder %s27, 1
      %p71 = por %p69, %p70
      %p73 = scmp.ne.s32.totalorder %s58, %s72
      %p74 = scmp.eq.s32.totalorder %s27, 0
      %p75 = por %p73, %p74
      %s77 = sadd.s32 %s76, 1
      %p80 = scmp.eq.s32.totalorder %s21, 1
      %p81 = scmp.ne.s32.totalorder %s76, %s78
      %p82 = scmp.eq.s32.totalorder %s21, 0
      %p83 = por %p81, %p82
      %p84 = scmp.ne.s32.totalorder %s76, %s78
      %p85 = scmp.eq.s32.totalorder %s26, 1
      %p86 = por %p84, %p85
      %p87 = scmp.ne.s32.totalorder %s78, %s79
      %p88 = scmp.eq.s32.totalorder %s26, 0
      %p89 = por %p87, %p88
      %p90 = scmp.ne.s32.totalorder %s78, %s79
      %p91 = scmp.eq.s32.totalorder %s27, 1
      %p92 = por %p90, %p91
      %p94 = scmp.ne.s32.totalorder %s79, %s93
      %p95 = scmp.eq.s32.totalorder %s27, 0
      %p96 = por %p94, %p95
      %s98 = sadd.s32 %s97, 1
      %p101 = scmp.eq.s32.totalorder %s21, 1
      %p102 = scmp.ne.s32.totalorder %s97, %s99
      %p103 = scmp.eq.s32.totalorder %s21, 0
      %p104 = por %p102, %p103
      %p105 = scmp.ne.s32.totalorder %s97, %s99
      %p106 = scmp.eq.s32.totalorder %s26, 1
      %p107 = por %p105, %p106
      %p108 = scmp.ne.s32.totalorder %s99, %s100
      %p109 = scmp.eq.s32.totalorder %s26, 0
      %p110 = por %p108, %p109
      %p111 = scmp.ne.s32.totalorder %s99, %s100
      %p112 = scmp.eq.s32.totalorder %s27, 1
      %p113 = por %p111, %p112
      %p115 = scmp.ne.s32.totalorder %s100, %s114
      %p116 = scmp.eq.s32.totalorder %s27, 0
      %p117 = por %p115, %p116
      %s119 = sadd.s32 %s118, 1
      %p122 = scmp.eq.s32.totalorder %s21, 1
      %p123 = scmp.ne.s32.totalorder %s118, %s120
      %p124 = scmp.eq.s32.totalorder %s21, 0
      %p125 = por %p123, %p124
      %p126 = scmp.ne.s32.totalorder %s118, %s120
      %p127 = scmp.eq.s32.totalorder %s26, 1
      %p128 = por %p126, %p127
      %p129 = scmp.ne.s32.totalorder %s120, %s121
      %p130 = scmp.eq.s32.totalorder %s26, 0
      %p131 = por %p129, %p130
      %p132 = scmp.ne.s32.totalorder %s120, %s121
      %p133 = scmp.eq.s32.totalorder %s27, 1
      %p134 = por %p132, %p133
      %p136 = scmp.ne.s32.totalorder %s121, %s135
      %p137 = scmp.eq.s32.totalorder %s27, 0
      %p138 = por %p136, %p137
      %s140 = sadd.s32 %s139, 1
      %p143 = scmp.eq.s32.totalorder %s21, 1
      %p144 = scmp.ne.s32.totalorder %s139, %s141
      %p145 = scmp.eq.s32.totalorder %s21, 0
      %p146 = por %p144, %p145
      %p147 = scmp.ne.s32.totalorder %s139, %s141
      %p148 = scmp.eq.s32.totalorder %s26, 1
      %p149 = por %p147, %p148
      %p150 = scmp.ne.s32.totalorder %s141, %s142
      %p151 = scmp.eq.s32.totalorder %s26, 0
      %p152 = por %p150, %p151
      %p153 = scmp.ne.s32.totalorder %s141, %s142
      %p154 = scmp.eq.s32.totalorder %s27, 1
      %p155 = por %p153, %p154
      %p157 = scmp.ne.s32.totalorder %s142, %s156
      %p158 = scmp.eq.s32.totalorder %s27, 0
      %p159 = por %p157, %p158
      %s161 = sadd.s32 %s160, 1
      %p164 = scmp.eq.s32.totalorder %s21, 1
      %p165 = scmp.ne.s32.totalorder %s160, %s162
      %p166 = scmp.eq.s32.totalorder %s21, 0
      %p167 = por %p165, %p166
      %p168 = scmp.ne.s32.totalorder %s160, %s162
      %p169 = scmp.eq.s32.totalorder %s26, 1
      %p170 = por %p168, %p169
      %p171 = scmp.ne.s32.totalorder %s162, %s163
      %p172 = scmp.eq.s32.totalorder %s26, 0
      %p173 = por %p171, %p172
      %p174 = scmp.ne.s32.totalorder %s162, %s163
      %p175 = scmp.eq.s32.totalorder %s27, 1
      %p176 = por %p174, %p175
      %p178 = scmp.ne.s32.totalorder %s163, %s177
      %p179 = scmp.eq.s32.totalorder %s27, 0
      %p180 = por %p178, %p179
      %s182 = sadd.s32 %s181, 1
      %p185 = scmp.eq.s32.totalorder %s21, 1
      %p186 = scmp.ne.s32.totalorder %s181, %s183
      %p187 = scmp.eq.s32.totalorder %s21, 0
      %p188 = por %p186, %p187
      %p189 = scmp.ne.s32.totalorder %s181, %s183
      %p190 = scmp.eq.s32.totalorder %s26, 1
      %p191 = por %p189, %p190
      %p192 = scmp.ne.s32.totalorder %s183, %s184
      %p193 = scmp.eq.s32.totalorder %s26, 0
      %p194 = por %p192, %p193
      %p195 = scmp.ne.s32.totalorder %s183, %s184
      %p196 = scmp.eq.s32.totalorder %s27, 1
      %p197 = por %p195, %p196
      %p199 = scmp.ne.s32.totalorder %s184, %s198
      %p200 = scmp.eq.s32.totalorder %s27, 0
      %p201 = por %p199, %p200
      %s203 = sadd.s32 %s202, 1
      %p206 = scmp.eq.s32.totalorder %s21, 1
      %p207 = scmp.ne.s32.totalorder %s202, %s204
      %p208 = scmp.eq.s32.totalorder %s21, 0
      %p209 = por %p207, %p208
      %p210 = scmp.ne.s32.totalorder %s202, %s204
      %p211 = scmp.eq.s32.totalorder %s26, 1
      %p212 = por %p210, %p211
      %p213 = scmp.ne.s32.totalorder %s204, %s205
      %p214 = scmp.eq.s32.totalorder %s26, 0
      %p215 = por %p213, %p214
      %p216 = scmp.ne.s32.totalorder %s204, %s205
      %p217 = scmp.eq.s32.totalorder %s27, 1
      %p218 = por %p216, %p217
      %p220 = scmp.ne.s32.totalorder %s205, %s219
      %p221 = scmp.eq.s32.totalorder %s27, 0
      %p222 = por %p220, %p221
      %s223 = ssub.s32 %s21, %s28
      %p224 = scmp.eq.s32.totalorder %s223, 0
      %s226 = sadd.s32 %s225, 1
      %s227 = scalar_select %p224, %s225, %s226
      %p230 = pneg %p224
      %p231 = scmp.eq.s32.totalorder %s21, 1
      %p232 = por %p230, %p231
      %p233 = scmp.ne.s32.totalorder %s225, %s228
      %p234 = scmp.eq.s32.totalorder %s21, 0
      %p235 = por %p233, %p234
      %p236 = scmp.ne.s32.totalorder %s225, %s228
      %p237 = scmp.eq.s32.totalorder %s26, 1
      %p238 = por %p236, %p237
      %p239 = scmp.ne.s32.totalorder %s228, %s229
      %p240 = scmp.eq.s32.totalorder %s26, 0
      %p241 = por %p239, %p240
      %p242 = scmp.ne.s32.totalorder %s228, %s229
      %p243 = scmp.eq.s32.totalorder %s27, 1
      %p244 = por %p242, %p243
      %p246 = scmp.ne.s32.totalorder %s229, %s245
      %p247 = scmp.eq.s32.totalorder %s27, 0
      %p248 = por %p246, %p247
      %p249 = scmp.le.s32.totalorder 1, %s21
      %p250 = scmp.lt.s32.totalorder %s21, 3
      %p251 = pnand %p249, %p250
      %p252 = pneg %p251
      // Predicated region
      $region9: #{tpu_custom_call.1} parent=5 // pred_check
        _
      $region10: #{tpu_custom_call.1} parent=5 // pred_check_branch
        %254 = sbr.rel (%p251) target = $region12
      $region11: #{tpu_custom_call.1} parent=5 // pred_region
        %s255 = ssub.s32 %s21, 1
        // Predicated region
        $region13: #{tpu_custom_call.1} parent=11 // pred_check
          %p256 = pneg %p68
        $region14: #{tpu_custom_call.1} parent=11 // pred_check_branch
          %258 = sbr.rel (%p256) target = $region16
        $region15: #{tpu_custom_call.1} parent=11 // pred_region
          _
        $region16: #{tpu_custom_call.1} parent=11 // pred_fallthru
          _
        // Predicated region
        $region17: #{tpu_custom_call.1} parent=11 // pred_check
          %p259 = pneg %p89
        $region18: #{tpu_custom_call.1} parent=11 // pred_check_branch
          %261 = sbr.rel (%p259) target = $region20
        $region19: #{tpu_custom_call.1} parent=11 // pred_region
          _
        $region20: #{tpu_custom_call.1} parent=11 // pred_fallthru
          _
        // Predicated region
        $region21: #{tpu_custom_call.1} parent=11 // pred_check
          %p262 = pneg %p110
        $region22: #{tpu_custom_call.1} parent=11 // pred_check_branch
          %264 = sbr.rel (%p262) target = $region24
        $region23: #{tpu_custom_call.1} parent=11 // pred_region
          _
        $region24: #{tpu_custom_call.1} parent=11 // pred_fallthru
          _
        // Predicated region
        $region25: #{tpu_custom_call.1} parent=11 // pred_check
          %p265 = pneg %p131
        $region26: #{tpu_custom_call.1} parent=11 // pred_check_branch
          %267 = sbr.rel (%p265) target = $region28
        $region27: #{tpu_custom_call.1} parent=11 // pred_region
          _
        $region28: #{tpu_custom_call.1} parent=11 // pred_fallthru
          _
        // Predicated region
        $region29: #{tpu_custom_call.1} parent=11 // pred_check
          %p268 = pneg %p152
        $region30: #{tpu_custom_call.1} parent=11 // pred_check_branch
          %270 = sbr.rel (%p268) target = $region32
        $region31: #{tpu_custom_call.1} parent=11 // pred_region
          _
        $region32: #{tpu_custom_call.1} parent=11 // pred_fallthru
          _
        // Predicated region
        $region33: #{tpu_custom_call.1} parent=11 // pred_check
          %p271 = pneg %p173
        $region34: #{tpu_custom_call.1} parent=11 // pred_check_branch
          %273 = sbr.rel (%p271) target = $region36
        $region35: #{tpu_custom_call.1} parent=11 // pred_region
          _
        $region36: #{tpu_custom_call.1} parent=11 // pred_fallthru
          _
        // Predicated region
        $region37: #{tpu_custom_call.1} parent=11 // pred_check
          %p274 = pneg %p194
        $region38: #{tpu_custom_call.1} parent=11 // pred_check_branch
          %276 = sbr.rel (%p274) target = $region40
        $region39: #{tpu_custom_call.1} parent=11 // pred_region
          _
        $region40: #{tpu_custom_call.1} parent=11 // pred_fallthru
          _
        // Predicated region
        $region41: #{tpu_custom_call.1} parent=11 // pred_check
          %p277 = pneg %p215
        $region42: #{tpu_custom_call.1} parent=11 // pred_check_branch
          %279 = sbr.rel (%p277) target = $region44
        $region43: #{tpu_custom_call.1} parent=11 // pred_region
          _
        $region44: #{tpu_custom_call.1} parent=11 // pred_fallthru
          _
      $region12: #{tpu_custom_call.1} parent=5 // pred_fallthru
        _
      %p280 = scmp.lt.s32.totalorder %s21, 2
      // Predicated region
      $region45: #{tpu_custom_call.1} parent=5 // pred_check
        %p281 = pneg %p280
      $region46: #{tpu_custom_call.1} parent=5 // pred_check_branch
        %283 = sbr.rel (%p281) target = $region48
      $region47: #{tpu_custom_call.1} parent=5 // pred_region
        // Predicated region
        $region49: #{tpu_custom_call.1} parent=47 // pred_check
          %p284 = pneg %p41
        $region50: #{tpu_custom_call.1} parent=47 // pred_check_branch
          %286 = sbr.rel (%p284) target = $region52
        $region51: #{tpu_custom_call.1} parent=47 // pred_region
          %s287 = sand.u32 %s31, 1
          %s288 = scalar_lea.sflag [#allocation4], %s287
          %s289 = sand.u32 %s31, 1
          %s290 = smul.addr %s289, 8
          %s291 = scalar_lea.vmem [#allocation3], %s290
          %s293 = ssub.s32 128, 128
          %294 = vsyncadd %s288, %s293
          %s295 = smul.addr %s21, 2
          %s296 = smul.addr %s295, 64
          %s297 = scalar_lea.hbm %s0, %s296
          %s299 = sshll.u32 %s291, 4
          %s300 = int_to_ptr.vmem [resolvable:$true] %s299
          %302 = dma.hbm_to_vmem [thread:$0]  %s297, 128, %s300, %s288
        $region52: #{tpu_custom_call.1} parent=47 // pred_fallthru
          _
      $region48: #{tpu_custom_call.1} parent=5 // pred_fallthru
        _
      %p303 = scmp.le.s32.totalorder 1, %s21
      %p304 = scmp.lt.s32.totalorder %s21, 3
      %p305 = pnand %p303, %p304
      %p306 = pneg %p305
      // Predicated region
      $region53: #{tpu_custom_call.1} parent=5 // pred_check
        _
      $region54: #{tpu_custom_call.1} parent=5 // pred_check_branch
        %308 = sbr.rel (%p305) target = $region56
      $region55: #{tpu_custom_call.1} parent=5 // pred_region
        %s309 = ssub.s32 %s21, 1
        %s310 = sand.u32 %s34, 1
        %s311 = scalar_lea.sflag [#allocation4], %s310
        %s312 = sand.u32 %s34, 1
        %s313 = smul.addr %s312, 8
        %s314 = scalar_lea.vmem [#allocation3], %s313
        // Predicated region
        $region57: #{tpu_custom_call.1} parent=55 // pred_check
          %p315 = pneg %p47
        $region58: #{tpu_custom_call.1} parent=55 // pred_check_branch
          %317 = sbr.rel (%p315) target = $region60
        $region59: #{tpu_custom_call.1} parent=55 // pred_region
          %318 = dma.done %s311, 128
        $region60: #{tpu_custom_call.1} parent=55 // pred_fallthru
          _
        %s319 = sand.u32 %s34, 1
        %s320 = scalar_lea.sflag [#allocation4], %s319
        %s321 = sand.u32 %s34, 1
        %s322 = smul.addr %s321, 8
        %s323 = scalar_lea.vmem [#allocation3], %s322
        %p324 = pneg %p47
        %p325 = pneg %p44
        %p326 = pneg %p68
        %p327 = pneg %p65
        %p328 = pneg %p89
        %p329 = pneg %p86
        %p330 = pneg %p110
        %p331 = pneg %p107
        %p332 = pneg %p131
        %p333 = pneg %p128
        %p334 = pneg %p152
        %p335 = pneg %p149
        %p336 = pneg %p173
        %p337 = pneg %p170
        %p338 = pneg %p194
        %p339 = pneg %p191
        %p340 = pneg %p215
        %p341 = pneg %p212
        %p342 = pneg %p241
        %p343 = pneg %p238
        %s344 = sand.u32 %s228, 1
        %s345 = scalar_lea.sflag [#allocation5], %s344
        %s346 = sand.u32 %s228, 1
        %s347 = smul.addr %s346, 8
        %s348 = scalar_lea.vmem [#allocation6], %s347
        %v349 = vld [vmem:[%s314] sm:$0xff]
        %v350 = vld [vmem:[%s1] sm:$0x3]
        %v351 = vld [vmem:[%s2] sm:$0x3]
        %353 = vset.pattern.permute.xlu0 0
        %354 = vperm.xlu0 %353, %v350
        %v355 = vpop.permute.xlu0 %354
        %v358 = vlaneseq
        %v359 = vshrl.u32 %v358, 7
        %v360 = vsub.s32 2, %v359
        %v361 = vrot.slane %v349, %v360
        %v362 = vlaneseq
        %v363 = vshrl.u32 %v362, 7
        %v364 = vsub.s32 6, %v363
        %v365 = vrot.slane %v349, %v364
        %v368 = vlaneseq
        %v369 = vshrl.u32 %v368, 7
        %v370 = vsub.s32 2, %v369
        %v371 = vrot.slane %v361, %v370
        %v372 = vlaneseq
        %v373 = vshrl.u32 %v372, 7
        %v374 = vsub.s32 2, %v373
        %v375 = vrot.slane %v365, %v374
        %v376 = vmul.f32 %v355, %v371
        %v377 = vmul.f32 %v355, %v375
        %378 = vset.pattern.permute.xlu0 1
        %379 = vperm.xlu0 %378, %v350
        %v380 = vpop.permute.xlu0 %379
        %v382 = vlaneseq
        %v383 = vshrl.u32 %v382, 7
        %v384 = vsub.s32 3, %v383
        %v385 = vrot.slane %v349, %v384
        %v386 = vlaneseq
        %v387 = vshrl.u32 %v386, 7
        %v388 = vsub.s32 7, %v387
        %v389 = vrot.slane %v349, %v388
        %v392 = vlaneseq
        %v393 = vshrl.u32 %v392, 7
        %v394 = vsub.s32 3, %v393
        %v395 = vrot.slane %v385, %v394
        %v396 = vlaneseq
        %v397 = vshrl.u32 %v396, 7
        %v398 = vsub.s32 3, %v397
        %v399 = vrot.slane %v389, %v398
        %v400 = vmul.f32 %v380, %v395
        %v401 = vmul.f32 %v380, %v399
        %v402 = vadd.f32 %v376, %v400
        %v403 = vadd.f32 %v377, %v401
        %405 = vset.pattern.permute.xlu0 0
        %406 = vperm.xlu0 %405, %v351
        %v407 = vpop.permute.xlu0 %406
        %v409 = vadd.f32 %v402, %v407
        %v410 = vadd.f32 %v403, %v407
        %v411 = vmax.f32 %v409, 0.0
        %v412 = vmax.f32 %v410, 0.0
        %v413 = vld [vmem:[%s3] sm:$0x3]
        %v414 = vld [vmem:[%s7] sm:$0x3]
        %v415 = vld [vmem:[%s8] sm:$0x3]
        %416 = vst [vmem:[#allocation2] sm:$0x3] 0.0
        %417 = vst [vmem:[#allocation2 + $0x6] sm:$0x3] 0.0
        %v420 = vcombine.low %v411, %v412
        %v422 = vunpack.c.l.s4 1983009808
        %v423 = vunpack.c.0.s8 %v422
        %v424 = vlaneseq
        %v425 = vshrl.u32 %v424, 7
        %v426 = vsub.s32 %v423, %v425
        %v427 = vrot.slane %v420, %v426
        %429 = vst [vmem:[#allocation2 + $0x2] sm:$0xf] %v427
        %v430 = vld [vmem:[#allocation2] sm:$0x3f]
        %432 = vset.pattern.permute.xlu0 0
        %433 = vperm.xlu0 %432, %v413
        %v434 = vpop.permute.xlu0 %433
        %v436 = vunpack.c.l.s4 269488144
        %v437 = vunpack.c.0.s8 %v436
        %v438 = vlaneseq
        %v439 = vshrl.u32 %v438, 7
        %v440 = vsub.s32 %v437, %v439
        %v441 = vrot.slane %v434, %v440
        %v443 = vmul.f32 %v430, %v441
        %444 = vset.pattern.permute.xlu0 3
        %445 = vperm.xlu0 %444, %v413
        %v446 = vpop.permute.xlu0 %445
        %v448 = vunpack.c.l.s4 269488144
        %v449 = vunpack.c.0.s8 %v448
        %v450 = vlaneseq
        %v451 = vshrl.u32 %v450, 7
        %v452 = vsub.s32 %v449, %v451
        %v453 = vrot.slane %v446, %v452
        %v455 = vmul.f32 %v430, %v453
        %457 = vrot.lane.b32.xlu0 %v455, 112
        %v458 = vpop.permute.xlu0 %457
        %v459 = vrot.slane %v458, 2
        %vm460 = vcmask 916480
        %v461 = vsel %vm460, %v458, %v459
        %v463 = vadd.f32 %v443, %v461
        %v464 = vld [vmem:[#allocation2 + $0x2] sm:$0x3f]
        %465 = vset.pattern.permute.xlu0 6
        %466 = vperm.xlu0 %465, %v413
        %v467 = vpop.permute.xlu0 %466
        %v469 = vunpack.c.l.s4 269488144
        %v470 = vunpack.c.0.s8 %v469
        %v471 = vlaneseq
        %v472 = vshrl.u32 %v471, 7
        %v473 = vsub.s32 %v470, %v472
        %v474 = vrot.slane %v467, %v473
        %v476 = vmul.f32 %v464, %v474
        %478 = vrot.lane.b32.xlu0 %v476, 96
        %v479 = vpop.permute.xlu0 %478
        %v480 = vrot.slane %v479, 6
        %vm481 = vcmask 785408
        %v482 = vsel %vm481, %v480, %v479
        %v484 = vadd.f32 %v463, %v482
        %v486 = vlaneseq
        %v487 = vshrl.u32 %v486, 7
        %v488 = vsub.s32 0, %v487
        %v489 = vrot.slane %v414, %v488
        %v490 = vlaneseq
        %v491 = vshrl.u32 %v490, 7
        %v492 = vsub.s32 1, %v491
        %v493 = vrot.slane %v414, %v492
        %v494 = vcombine.low %v489, %v493
        %v496 = vunpack.c.l.s4 1983009808
        %v497 = vunpack.c.0.s8 %v496
        %v498 = vlaneseq
        %v499 = vshrl.u32 %v498, 7
        %v500 = vsub.s32 %v497, %v499
        %v501 = vrot.slane %v494, %v500
        %502 = vrot.lane.b32.xlu0 %v501, 111
        %v503 = vpop.permute.xlu0 %502
        %v504 = vrot.slane %v503, 6
        %vm505 = vcmask 908288
        %v506 = vsel %vm505, %v504, %v503
        %v508 = vmul.f32 %v484, %v506
        %v509 = vld [vmem:[#allocation2] sm:$0x3f]
        %510 = vset.pattern.permute.xlu0 1
        %511 = vperm.xlu0 %510, %v413
        %v512 = vpop.permute.xlu0 %511
        %v514 = vunpack.c.l.s4 269488144
        %v515 = vunpack.c.0.s8 %v514
        %v516 = vlaneseq
        %v517 = vshrl.u32 %v516, 7
        %v518 = vsub.s32 %v515, %v517
        %v519 = vrot.slane %v512, %v518
        %v521 = vmul.f32 %v509, %v519
        %v522 = vld [vmem:[#allocation2 + $0x2] sm:$0xf]
        %523 = vset.pattern.permute.xlu0 4
        %524 = vperm.xlu0 %523, %v413
        %v525 = vpop.permute.xlu0 %524
        %v527 = vunpack.c.l.s4 269488144
        %v528 = vunpack.c.0.s8 %v527
        %v529 = vlaneseq
        %v530 = vshrl.u32 %v529, 7
        %v531 = vsub.s32 %v528, %v530
        %v532 = vrot.slane %v525, %v531
        %v534 = vmul.f32 %v522, %v532
        %536 = vrot.lane.b32.xlu0 %v534, 112
        %v537 = vpop.permute.xlu0 %536
        %v538 = vrot.slane %v537, 6
        %v539 = vsel %vm460, %v538, %v537
        %v541 = vadd.f32 %v521, %v539
        %v542 = vld [vmem:[#allocation2 + $0x2] sm:$0x3f]
        %543 = vset.pattern.permute.xlu0 7
        %544 = vperm.xlu0 %543, %v413
        %v545 = vpop.permute.xlu0 %544
        %v547 = vunpack.c.l.s4 269488144
        %v548 = vunpack.c.0.s8 %v547
        %v549 = vlaneseq
        %v550 = vshrl.u32 %v549, 7
        %v551 = vsub.s32 %v548, %v550
        %v552 = vrot.slane %v545, %v551
        %v554 = vmul.f32 %v542, %v552
        %556 = vrot.lane.b32.xlu0 %v554, 96
        %v557 = vpop.permute.xlu0 %556
        %v558 = vrot.slane %v557, 6
        %v559 = vsel %vm481, %v558, %v557
        %v561 = vadd.f32 %v541, %v559
        %563 = vrot.lane.b32.xlu0 %v561, 127
        %v564 = vpop.permute.xlu0 %563
        %v565 = vrot.slane %v564, 2
        %vm566 = vcmask 1039360
        %v567 = vsel %vm566, %v564, %v565
        %v569 = vadd.f32 %v508, %v567
        %570 = vset.pattern.permute.xlu0 2
        %571 = vperm.xlu0 %570, %v413
        %v572 = vpop.permute.xlu0 %571
        %v574 = vunpack.c.l.s4 269488144
        %v575 = vunpack.c.0.s8 %v574
        %v576 = vlaneseq
        %v577 = vshrl.u32 %v576, 7
        %v578 = vsub.s32 %v575, %v577
        %v579 = vrot.slane %v572, %v578
        %v581 = vmul.f32 %v509, %v579
        %582 = vset.pattern.permute.xlu0 5
        %583 = vperm.xlu0 %582, %v413
        %v584 = vpop.permute.xlu0 %583
        %v586 = vunpack.c.l.s4 269488144
        %v587 = vunpack.c.0.s8 %v586
        %v588 = vlaneseq
        %v589 = vshrl.u32 %v588, 7
        %v590 = vsub.s32 %v587, %v589
        %v591 = vrot.slane %v584, %v590
        %v593 = vmul.f32 %v542, %v591
        %595 = vrot.lane.b32.xlu0 %v593, 112
        %v596 = vpop.permute.xlu0 %595
        %v597 = vrot.slane %v596, 6
        %v598 = vsel %vm460, %v597, %v596
        %v600 = vadd.f32 %v581, %v598
        %601 = vset.pattern.permute.xlu0 8
        %602 = vperm.xlu0 %601, %v413
        %v603 = vpop.permute.xlu0 %602
        %v605 = vunpack.c.l.s4 269488144
        %v606 = vunpack.c.0.s8 %v605
        %v607 = vlaneseq
        %v608 = vshrl.u32 %v607, 7
        %v609 = vsub.s32 %v606, %v608
        %v610 = vrot.slane %v603, %v609
        %v612 = vmul.f32 %v542, %v610
        %614 = vrot.lane.b32.xlu0 %v612, 96
        %v615 = vpop.permute.xlu0 %614
        %v616 = vrot.slane %v615, 6
        %v617 = vsel %vm481, %v616, %v615
        %v619 = vadd.f32 %v600, %v617
        %v621 = vlaneseq
        %v622 = vshrl.u32 %v621, 7
        %v623 = vsub.s32 0, %v622
        %v624 = vrot.slane %v415, %v623
        %v625 = vlaneseq
        %v626 = vshrl.u32 %v625, 7
        %v627 = vsub.s32 1, %v626
        %v628 = vrot.slane %v415, %v627
        %v629 = vcombine.low %v624, %v628
        %v631 = vunpack.c.l.s4 1983009808
        %v632 = vunpack.c.0.s8 %v631
        %v633 = vlaneseq
        %v634 = vshrl.u32 %v633, 7
        %v635 = vsub.s32 %v632, %v634
        %v636 = vrot.slane %v629, %v635
        %637 = vrot.lane.b32.xlu0 %v636, 113
        %v638 = vpop.permute.xlu0 %637
        %v639 = vrot.slane %v638, 6
        %vm640 = vcmask 924672
        %v641 = vsel %vm640, %v639, %v638
        %v643 = vmul.f32 %v619, %v641
        %645 = vrot.lane.b32.xlu0 %v643, 126
        %v646 = vpop.permute.xlu0 %645
        %v647 = vrot.slane %v646, 2
        %vm648 = vcmask 1031168
        %v649 = vsel %vm648, %v646, %v647
        %v651 = vadd.f32 %v569, %v649
        %v652 = vld [vmem:[%s4] sm:$0x3]
        %654 = vset.pattern.permute.xlu0 0
        %655 = vperm.xlu0 %654, %v652
        %v656 = vpop.permute.xlu0 %655
        %v658 = vunpack.c.l.s4 269488144
        %v659 = vunpack.c.0.s8 %v658
        %v660 = vlaneseq
        %v661 = vshrl.u32 %v660, 7
        %v662 = vsub.s32 %v659, %v661
        %v663 = vrot.slane %v656, %v662
        %v665 = vadd.f32 %v651, %v663
        %v666 = vld [vmem:[%s5] sm:$0x3]
        %v667 = vld [vmem:[%s6] sm:$0x3]
        %669 = vset.pattern.permute.xlu0 0
        %670 = vperm.xlu0 %669, %v666
        %v671 = vpop.permute.xlu0 %670
        %v674 = vlaneseq
        %v675 = vshrl.u32 %v674, 7
        %v676 = vsub.s32 0, %v675
        %v677 = vrot.slane %v665, %v676
        %v678 = vlaneseq
        %v679 = vshrl.u32 %v678, 7
        %v680 = vsub.s32 2, %v679
        %v681 = vrot.slane %v665, %v680
        %v682 = vlaneseq
        %v683 = vshrl.u32 %v682, 7
        %v684 = vsub.s32 4, %v683
        %v685 = vrot.slane %v665, %v684
        %v689 = vlaneseq
        %v690 = vshrl.u32 %v689, 7
        %v691 = vsub.s32 0, %v690
        %v692 = vrot.slane %v677, %v691
        %v693 = vlaneseq
        %v694 = vshrl.u32 %v693, 7
        %v695 = vsub.s32 0, %v694
        %v696 = vrot.slane %v681, %v695
        %v697 = vlaneseq
        %v698 = vshrl.u32 %v697, 7
        %v699 = vsub.s32 0, %v698
        %v700 = vrot.slane %v685, %v699
        %v701 = vmul.f32 %v671, %v692
        %v702 = vmul.f32 %v671, %v696
        %v703 = vmul.f32 %v671, %v700
        %704 = vset.pattern.permute.xlu0 1
        %705 = vperm.xlu0 %704, %v666
        %v706 = vpop.permute.xlu0 %705
        %v708 = vlaneseq
        %v709 = vshrl.u32 %v708, 7
        %v710 = vsub.s32 1, %v709
        %v711 = vrot.slane %v665, %v710
        %v712 = vlaneseq
        %v713 = vshrl.u32 %v712, 7
        %v714 = vsub.s32 3, %v713
        %v715 = vrot.slane %v665, %v714
        %v716 = vlaneseq
        %v717 = vshrl.u32 %v716, 7
        %v718 = vsub.s32 5, %v717
        %v719 = vrot.slane %v665, %v718
        %v723 = vlaneseq
        %v724 = vshrl.u32 %v723, 7
        %v725 = vsub.s32 1, %v724
        %v726 = vrot.slane %v711, %v725
        %v727 = vlaneseq
        %v728 = vshrl.u32 %v727, 7
        %v729 = vsub.s32 1, %v728
        %v730 = vrot.slane %v715, %v729
        %v731 = vlaneseq
        %v732 = vshrl.u32 %v731, 7
        %v733 = vsub.s32 1, %v732
        %v734 = vrot.slane %v719, %v733
        %v735 = vmul.f32 %v706, %v726
        %v736 = vmul.f32 %v706, %v730
        %v737 = vmul.f32 %v706, %v734
        %v738 = vadd.f32 %v701, %v735
        %v739 = vadd.f32 %v702, %v736
        %v740 = vadd.f32 %v703, %v737
        %742 = vset.pattern.permute.xlu0 0
        %743 = vperm.xlu0 %742, %v667
        %v744 = vpop.permute.xlu0 %743
        %v746 = vadd.f32 %v738, %v744
        %v747 = vadd.f32 %v739, %v744
        %v748 = vadd.f32 %v740, %v744
        %v749 = vmax.f32 %v746, 0.0
        %v750 = vmax.f32 %v747, 0.0
        %v751 = vmax.f32 %v748, 0.0
        %v753 = vunpack.c.l.s4 1966171168
        %v754 = vunpack.c.0.s8 %v753
        %v755 = vlaneseq
        %v756 = vshrl.u32 %v755, 7
        %v757 = vsub.s32 %v754, %v756
        %v758 = vrot.slane %v349, %v757
        %v760 = vunpack.c.l.s4 1966171168
        %v761 = vunpack.c.0.s8 %v760
        %v762 = vlaneseq
        %v763 = vshrl.u32 %v762, 7
        %v764 = vsub.s32 %v761, %v763
        %v765 = vrot.slane %v758, %v764
        %v767 = vlaneseq
        %vm768 = vcmp.ge.s32.totalorder %v767, 0
        %vm769 = vcmp.lt.s32.totalorder %v767, 256
        %vm770 = vmand %vm768, %vm769
        %771 = vst.msk [vmem:[%s348] ss:$4 sm:$0x3] %vm770, %v765
        %v775 = vcombine.low %v749, %v750
        %v777 = vunpack.c.l.s4 1966171168
        %v778 = vunpack.c.0.s8 %v777
        %v779 = vlaneseq
        %v780 = vshrl.u32 %v779, 7
        %v781 = vsub.s32 %v778, %v780
        %v782 = vrot.slane %v775, %v781
        %v784 = vunpack.c.l.s4 1966171168
        %v785 = vunpack.c.0.s8 %v784
        %v786 = vlaneseq
        %v787 = vshrl.u32 %v786, 7
        %v788 = vsub.s32 %v785, %v787
        %v789 = vrot.slane %v751, %v788
        %v790 = vcombine.low %v782, %v789
        %v792 = vunpack.c.l.s4 1966171168
        %v793 = vunpack.c.0.s8 %v792
        %v794 = vlaneseq
        %v795 = vshrl.u32 %v794, 7
        %v796 = vsub.s32 %v793, %v795
        %v797 = vrot.slane %v790, %v796
        %798 = vrot.lane.b32.xlu0 %v797, 17
        %v799 = vpop.permute.xlu0 %798
        %v800 = vrot.slane %v799, 1
        %vm801 = vcmask 138240
        %v802 = vsel %vm801, %v799, %v800
        %s804 = scalar_lea.vmem %s348, 1 [#allocation6]
        %805 = vst.msk [vmem:[%s804] ss:$4 sm:$0x3] %vm770, %v802
        %v806 = vcombine.high %v758, %v758
        %v808 = vunpack.c.l.s4 1966171168
        %v809 = vunpack.c.0.s8 %v808
        %v810 = vlaneseq
        %v811 = vshrl.u32 %v810, 7
        %v812 = vsub.s32 %v809, %v811
        %v813 = vrot.slane %v806, %v812
        %s815 = scalar_lea.vmem %s348, 2 [#allocation6]
        %816 = vst.msk [vmem:[%s815] ss:$4 sm:$0x3] %vm770, %v813
        %v817 = vcombine.high %v782, %v789
        %v819 = vunpack.c.l.s4 1966171168
        %v820 = vunpack.c.0.s8 %v819
        %v821 = vlaneseq
        %v822 = vshrl.u32 %v821, 7
        %v823 = vsub.s32 %v820, %v822
        %v824 = vrot.slane %v817, %v823
        %825 = vrot.lane.b32.xlu0 %v824, 17
        %v826 = vpop.permute.xlu0 %825
        %v827 = vrot.slane %v826, 1
        %v828 = vsel %vm801, %v826, %v827
        %s830 = scalar_lea.vmem %s348, 3 [#allocation6]
        %831 = vst.msk [vmem:[%s830] ss:$4 sm:$0x3] %vm770, %v828
        %s832 = sand.u32 %s228, 1
        %s833 = scalar_lea.sflag [#allocation5], %s832
        %s834 = sand.u32 %s228, 1
        %s835 = smul.addr %s834, 8
        %s836 = scalar_lea.vmem [#allocation6], %s835
        // Predicated region
        $region61: #{tpu_custom_call.1} parent=55 // pred_check
          %p837 = pneg %p238
        $region62: #{tpu_custom_call.1} parent=55 // pred_check_branch
          %839 = sbr.rel (%p837) target = $region64
        $region63: #{tpu_custom_call.1} parent=55 // pred_region
          %s841 = ssub.s32 128, 128
          %842 = vsyncadd %s833, %s841
          %s843 = smul.addr %s26, 2
          %s844 = smul.addr %s843, 64
          %s845 = scalar_lea.hbm %s9, %s844
          %s847 = sshll.u32 %s836, 4
          %s848 = int_to_ptr.vmem [resolvable:$true] %s847
          %850 = dma.vmem_to_hbm [thread:$0]  %s848, 128, %s845, %s833
        $region64: #{tpu_custom_call.1} parent=55 // pred_fallthru
          _
      $region56: #{tpu_custom_call.1} parent=5 // pred_fallthru
        _
      %p851 = scmp.le.s32.totalorder 2, %s21
      // Predicated region
      $region65: #{tpu_custom_call.1} parent=5 // pred_check
        %p852 = pneg %p851
      $region66: #{tpu_custom_call.1} parent=5 // pred_check_branch
        %854 = sbr.rel (%p852) target = $region68
      $region67: #{tpu_custom_call.1} parent=5 // pred_region
        %s855 = ssub.s32 %s21, 2
        // Predicated region
        $region69: #{tpu_custom_call.1} parent=67 // pred_check
          %p856 = pneg %p244
        $region70: #{tpu_custom_call.1} parent=67 // pred_check_branch
          %858 = sbr.rel (%p856) target = $region72
        $region71: #{tpu_custom_call.1} parent=67 // pred_region
          %s859 = sand.u32 %s229, 1
          %s860 = scalar_lea.sflag [#allocation5], %s859
          %s861 = sand.u32 %s229, 1
          %s862 = smul.addr %s861, 8
          %s863 = scalar_lea.vmem [#allocation6], %s862
          %864 = dma.done %s860, 128
        $region72: #{tpu_custom_call.1} parent=67 // pred_fallthru
          _
      $region68: #{tpu_custom_call.1} parent=5 // pred_fallthru
        _
    $region6: #{tpu_custom_call.1} parent=1 // loop_footer
      %s25 = sadd.s32 1, %s21
    $region7: #{tpu_custom_call.1} parent=1 // loop_footer_branch
      %20 = sbr.rel target = $region3
    $region8: #{tpu_custom_call.1} parent=1 // loop_exit
      _
    %865 = vsyncpa [#allocation4], 1
    %s866 = scalar_lea.sflag [#allocation4], 1
    %867 = vsyncpa %s866, 1
    %868 = vsyncpa [#allocation5], 1
    %s869 = scalar_lea.sflag [#allocation5], 1
    %870 = vsyncpa %s869, 1

</llo_original>
